<compile_context>
chip_gen: v7x
topology: tpu7x:2x2x1
jax: 0.10.0
libtpu: 0.0.40
codegen_flags: <defaults>
</compile_context>

<pallas_src>
import jax
import jax.numpy as jnp
from jax.experimental import pallas as pl
from jax.experimental.pallas import tpu as pltpu

_LANE = 128  # lane width; (1, TB) output blocks must be 128-aligned


def _round_up(n, m):
    return ((n + m - 1) // m) * m


def _linear_kernel(x_ref, w_ref, b_ref, o_ref):
    # x_ref: (TB, F_in) VMEM tile; w_ref: (1, F_in) VMEM (resident);
    # b_ref: (1,) f32 SMEM scalar;  o_ref: (1, TB) VMEM (lane-dense).
    #
    # MXU: contract F_in of w (LHS, dim 1) with F_in of x (RHS, dim 1)
    # -> (1, TB). Same "contract-on-last-dims" pattern as q @ k^T in flash
    # attention, so Mosaic lowers it to vmatmul without transposing the
    # full x tile.
    acc = jax.lax.dot_general(
        w_ref[...], x_ref[...],
        dimension_numbers=(((1,), (1,)), ((), ())),
        preferred_element_type=jnp.float32)           # (1, TB) f32
    o_ref[...] = (acc + b_ref[0]).astype(o_ref.dtype)


def simple_net_forward(x, weight, bias, *, tb=16384):
    """y = x @ weight.T + bias  (PyTorch nn.Linear(10, 1) semantics).

    x:      (B, 10) float32
    weight: (1, 10) float32   (PyTorch layout: (out_features, in_features))
    bias:   (1,)    float32
    returns (B, 1)  float32

    tb: max batch tile size; rounded to a multiple of 128 so the lane-dense
        (1, TB) output block is aligned. Default 16384 keeps the
        double-buffered, 128-lane-padded x tiles (2 x 8 MiB) inside the
        explicit 40 MiB VMEM limit on v5e / v6e / v7x.
    """
    B, F_in = x.shape
    F_out, F_in_w = weight.shape
    assert F_out == 1 and F_in_w == F_in, "kernel specialized to nn.Linear(10, 1)"

    tb = max(_LANE, _round_up(tb, _LANE))
    # Clamp so the grid has >= 2 steps whenever B allows: shards rows across
    # v7x's two TensorCores and enables DMA/compute pipelining everywhere.
    TB = max(_LANE, min(tb, _round_up(pl.cdiv(B, 2), _LANE)))
    grid = (pl.cdiv(B, TB),)

    cost = pl.CostEstimate(
        flops=2 * B * F_in * F_out,
        transcendentals=0,
        bytes_accessed=4 * (B * F_in + F_out * F_in + F_out + B * F_out))

    out = pl.pallas_call(
        _linear_kernel,
        out_shape=jax.ShapeDtypeStruct((1, B), jnp.float32),
        grid_spec=pl.GridSpec(
            grid=grid,
            in_specs=[
                # x: tiled over the batch axis -> pipelined HBM->VMEM DMAs.
                pl.BlockSpec((TB, F_in), lambda i: (i, 0)),
                # weight: tiny, constant index_map -> stays resident in VMEM.
                pl.BlockSpec((F_out, F_in), lambda i: (0, 0)),
                # bias: scalar in SMEM (no padded VMEM tile, no per-step DMA).
                pl.BlockSpec(memory_space=pltpu.MemorySpace.SMEM),
            ],
            # Lane-dense output: full-lane stores + contiguous writeback DMA.
            out_specs=pl.BlockSpec((1, TB), lambda i: (0, i)),
        ),
        compiler_params=pltpu.CompilerParams(
            dimension_semantics=("parallel",),
            vmem_limit_bytes=40 << 20),
        cost_estimate=cost,
    )(x, weight, bias)

    # (1, B) -> (B, 1): identical row-major data, effectively free.
    return out.reshape(B, F_out)


if __name__ == "__main__":
    key = jax.random.PRNGKey(0)
    kx, kw, kb = jax.random.split(key, 3)

    F_in, F_out = 10, 1

    # Deterministic synthetic parameters (shapes from nn.Linear(10, 1)).
    weight = jax.random.normal(kw, (F_out, F_in), dtype=jnp.float32) * 0.1
    bias = jax.random.normal(kb, (F_out,), dtype=jnp.float32) * 0.1

    # Small batch (per the module spec) plus a non-multiple-of-128 batch and a
    # larger one to exercise the multi-step grid, partial-block masking and
    # the lane-dense output path.
    for B in (8, 300, 4096):
        xb = jax.random.normal(jax.random.fold_in(kx, B), (B, F_in),
                               dtype=jnp.float32)
        y = simple_net_forward(xb, weight, bias)
        jax.block_until_ready(y)

        y_ref = xb @ weight.T + bias
        assert y.shape == (B, F_out)
        assert jnp.allclose(y, y_ref, atol=1e-5, rtol=1e-5), f"mismatch at B={B}"

    print("KERNEL_OK")
</pallas_src>

<mosaic_0001>
module attributes {stable_mosaic.version = 11 : i64} {
  func.func @_linear_kernel(%arg0: i32, %arg1: memref<128x10xf32, #tpu.memory_space<vmem>>, %arg2: memref<1x10xf32, #tpu.memory_space<vmem>>, %arg3: memref<1xf32, #tpu.memory_space<smem>>, %arg4: memref<1x128xf32, #tpu.memory_space<vmem>>) attributes {dimension_semantics = [#tpu.dimension_semantics<parallel>], iteration_bounds = array<i64: 1>, scalar_prefetch = 0 : i64, scratch_operands = 0 : i64, tpu.core_type = #tpu.core_type<tc>, window_params = [{transform_indices = @transform_0, window_bounds = array<i64: 128, 10>}, {pipeline_mode = #tpu.pipeline_mode<synchronous>, transform_indices = @transform_1, window_bounds = array<i64: 1, 10>}, {transform_indices = @transform_2, window_bounds = array<i64: 1>}, {transform_indices = @transform_3, window_bounds = array<i64: 1, 128>}]} {
    %c0 = arith.constant 0 : index
    %c0_0 = arith.constant 0 : index
    %0 = vector.load %arg2[%c0, %c0_0] : memref<1x10xf32, #tpu.memory_space<vmem>>, vector<1x10xf32>
    %c0_1 = arith.constant 0 : index
    %c0_2 = arith.constant 0 : index
    %1 = vector.load %arg1[%c0_1, %c0_2] : memref<128x10xf32, #tpu.memory_space<vmem>>, vector<128x10xf32>
    %cst = arith.constant dense<0.000000e+00> : vector<1x128xf32>
    %2 = tpu.matmul %0, %1, %cst {dimension_numbers = #tpu.dot_dimension_numbers<[1], [1], [0], [0], [0, 0, 1, 0], [], []>} : vector<1x10xf32>, vector<128x10xf32>, vector<1x128xf32> -> vector<1x128xf32>
    %c0_3 = arith.constant 0 : index
    %3 = memref.load %arg3[%c0_3] : memref<1xf32, #tpu.memory_space<smem>>
    %4 = vector.broadcast %3 : f32 to vector<1x128xf32>
    %5 = arith.addf %2, %4 : vector<1x128xf32>
    %c0_4 = arith.constant 0 : index
    %c0_5 = arith.constant 0 : index
    %6 = vector.load %arg4[%c0_4, %c0_5] : memref<1x128xf32, #tpu.memory_space<vmem>>, vector<1x128xf32>
    tpu.vector_store %arg4[%c0_4, %c0_5], %5 {strides = array<i32>} : memref<1x128xf32, #tpu.memory_space<vmem>>, vector<1x128xf32>,
    return
  }
  func.func @transform_0(%arg0: i32) -> (i32, i32) {
    %c0_i32 = arith.constant 0 : i32
    %c0_i32_0 = arith.constant 0 : i32
    return %arg0, %c0_i32 : i32, i32
  }
  func.func @transform_1(%arg0: i32) -> (i32, i32) {
    %c0_i32 = arith.constant 0 : i32
    %c0_i32_0 = arith.constant 0 : i32
    %c0_i32_1 = arith.constant 0 : i32
    return %c0_i32, %c0_i32_0 : i32, i32
  }
  func.func @transform_2(%arg0: i32) -> i32 {
    %c0_i32 = arith.constant 0 : i32
    %c0_i32_0 = arith.constant 0 : i32
    return %c0_i32 : i32
  }
  func.func @transform_3(%arg0: i32) -> (i32, i32) {
    %c0_i32 = arith.constant 0 : i32
    %c0_i32_0 = arith.constant 0 : i32
    return %c0_i32, %arg0 : i32, i32
  }
}

</mosaic_0001>

<llo_original>
// kernel: tpu_custom_call.1
$region0: #{tpu_custom_call.1}
  #allocation0 [shape = 'u32[]', space=smem, size = 0x4, offset = 0x4, fixed_abs, tag = 'smem constant byte address 0x4 - core index']
  #allocation1 [shape = 'u32[144,128]{1,0:T(1,128)}', space=vmem, size = 0x12000, scoped, tag = 'internal scratch']
  #allocation2 [shape = 'f32[1]{0:T(128)S(6)}', space=smem, size = 0x200, scoped, tag = 'scoped memory for tpu_custom_call.1']
  %s0 = inlined_call_operand.hbm [shape: f32[8,10], index: 0, kind: input, shape index: {}]
  %s1 = inlined_call_operand.vmem [shape: f32[1,10], index: 1, kind: input, shape index: {}]
  %s2 = inlined_call_operand.<no memory space> [shape: f32[1], index: 2, kind: input, shape index: {}]
  %s3 = inlined_call_operand.hbm [shape: f32[1,8], index: 3, kind: output, shape index: {}]
  %s4 = sld [smem:[#allocation0]]
  $region26: #{tpu_custom_call.1} parent=0
    _
  %s6 = ssub.s32 1, %s4
  %s7 = scalar_select 0, %s6, %s4
  %8 = sst [smem:[#allocation2]] %s2
  $region1: #{tpu_custom_call.1} parent=0
    #allocation3 [shape = 'u8[65536]{0}', space=vmem, size = 0x10000, scoped, tag = 'input window, operand 0, single buffered']
    #allocation4 [shape = 's32[1]{0}', space=sflag, size = 0x4, scoped, tag = 'scoped memory for tpu_custom_call.1']
    #allocation5 [shape = 's32[1]{0}', space=sflag, size = 0x4, scoped, tag = 'scoped memory for tpu_custom_call.1']
    #allocation6 [shape = 'u8[512]{0}', space=vmem, size = 0x400, scoped, tag = 'output window, operand 0, single buffered']
    %9 = vsyncpa [#allocation4], 0
    %10 = vsyncpa [#allocation5], 0
    // Predicated region
    $region2: #{tpu_custom_call.1} parent=1 // pred_check
      _
    $region3: #{tpu_custom_call.1} parent=1 // pred_check_branch
      %12 = sbr.rel (0) target = $region5
    $region4: #{tpu_custom_call.1} parent=1 // pred_region
      %s14 = ssub.s32 2048, 128
      %15 = vsyncadd [#allocation4], %s14
      %s16 = sshll.u32 [#allocation3], 4
      %s17 = int_to_ptr.vmem [resolvable:$true] %s16
      %22 = dma.hbm_to_vmem [thread:$0]  %s0, 128, %s17, [#allocation4], 128, 128, 8
    $region5: #{tpu_custom_call.1} parent=1 // pred_fallthru
      _
    // Predicated region
    $region6: #{tpu_custom_call.1} parent=1 // pred_check
      _
    $region7: #{tpu_custom_call.1} parent=1 // pred_check_branch
      %24 = sbr.rel (0) target = $region9
    $region8: #{tpu_custom_call.1} parent=1 // pred_region
      _
    $region9: #{tpu_custom_call.1} parent=1 // pred_fallthru
      _
    // Predicated region
    $region10: #{tpu_custom_call.1} parent=1 // pred_check
      _
    $region11: #{tpu_custom_call.1} parent=1 // pred_check_branch
      %26 = sbr.rel (0) target = $region13
    $region12: #{tpu_custom_call.1} parent=1 // pred_region
      _
    $region13: #{tpu_custom_call.1} parent=1 // pred_fallthru
      _
    // Predicated region
    $region14: #{tpu_custom_call.1} parent=1 // pred_check
      _
    $region15: #{tpu_custom_call.1} parent=1 // pred_check_branch
      %28 = sbr.rel (0) target = $region17
    $region16: #{tpu_custom_call.1} parent=1 // pred_region
      %29 = dma.done [#allocation4], 2048
    $region17: #{tpu_custom_call.1} parent=1 // pred_fallthru
      _
    %v30 = vld [vmem:[%s1] sm:$0x1]
    %v31 = vld [vmem:[#allocation3] sm:$0xff]
    %v32 = vld [vmem:[#allocation3 + $0x8] sm:$0xff]
    %v33 = vld [vmem:[#allocation3 + $0x10] sm:$0xff]
    %v34 = vld [vmem:[#allocation3 + $0x18] sm:$0xff]
    %v35 = vld [vmem:[#allocation3 + $0x20] sm:$0xff]
    %v36 = vld [vmem:[#allocation3 + $0x28] sm:$0xff]
    %v37 = vld [vmem:[#allocation3 + $0x30] sm:$0xff]
    %v38 = vld [vmem:[#allocation3 + $0x38] sm:$0xff]
    %v39 = vld [vmem:[#allocation3 + $0x40] sm:$0xff]
    %v40 = vld [vmem:[#allocation3 + $0x48] sm:$0xff]
    %v41 = vld [vmem:[#allocation3 + $0x50] sm:$0xff]
    %v42 = vld [vmem:[#allocation3 + $0x58] sm:$0xff]
    %v43 = vld [vmem:[#allocation3 + $0x60] sm:$0xff]
    %v44 = vld [vmem:[#allocation3 + $0x68] sm:$0xff]
    %v45 = vld [vmem:[#allocation3 + $0x70] sm:$0xff]
    %v46 = vld [vmem:[#allocation3 + $0x78] sm:$0xff]
    %s47 = sld [smem:[#allocation2]]
    %v48 = vstv %s47
    %vm49 = vcmask 80896
    %v51 = vsel %vm49, %v30, 0
    %v54 = vsel %vm49, %v31, 0
    %v57 = vsel %vm49, %v32, 0
    %v60 = vsel %vm49, %v33, 0
    %v63 = vsel %vm49, %v34, 0
    %v66 = vsel %vm49, %v35, 0
    %v69 = vsel %vm49, %v36, 0
    %v72 = vsel %vm49, %v37, 0
    %v75 = vsel %vm49, %v38, 0
    %v78 = vsel %vm49, %v39, 0
    %v81 = vsel %vm49, %v40, 0
    %v84 = vsel %vm49, %v41, 0
    %v87 = vsel %vm49, %v42, 0
    %v90 = vsel %vm49, %v43, 0
    %v93 = vsel %vm49, %v44, 0
    %v96 = vsel %vm49, %v45, 0
    %v99 = vsel %vm49, %v46, 0
    %101 = vmatprep.subr.mxu0 0.0
    %102 = vmatpush1.xpose.msra.mxu0 %v54
    %103 = vmatprep.subr.mxu0 0.0
    %104 = vmatpush1.xpose.msra.mxu0 %v57
    %105 = vmatprep.subr.mxu0 0.0
    %106 = vmatpush1.xpose.msra.mxu0 %v60
    %107 = vmatprep.subr.mxu0 0.0
    %108 = vmatpush1.xpose.msra.mxu0 %v63
    %109 = vmatprep.subr.mxu0 0.0
    %110 = vmatpush1.xpose.msra.mxu0 %v66
    %111 = vmatprep.subr.mxu0 0.0
    %112 = vmatpush1.xpose.msra.mxu0 %v69
    %113 = vmatprep.subr.mxu0 0.0
    %114 = vmatpush1.xpose.msra.mxu0 %v72
    %115 = vmatprep.subr.mxu0 0.0
    %116 = vmatpush1.xpose.msra.mxu0 %v75
    %117 = vmatprep.subr.mxu0 0.0
    %118 = vmatpush1.xpose.msra.mxu0 %v78
    %119 = vmatprep.subr.mxu0 0.0
    %120 = vmatpush1.xpose.msra.mxu0 %v81
    %121 = vmatprep.subr.mxu0 0.0
    %122 = vmatpush1.xpose.msra.mxu0 %v84
    %123 = vmatprep.subr.mxu0 0.0
    %124 = vmatpush1.xpose.msra.mxu0 %v87
    %125 = vmatprep.subr.mxu0 0.0
    %126 = vmatpush1.xpose.msra.mxu0 %v90
    %127 = vmatprep.subr.mxu0 0.0
    %128 = vmatpush1.xpose.msra.mxu0 %v93
    %129 = vmatprep.subr.mxu0 0.0
    %130 = vmatpush1.xpose.msra.mxu0 %v96
    %131 = vmatprep.subr.mxu0 0.0
    %132 = vmatpush1.xpose.msra.mxu0 %v99
    %133 = vmatprep.subr.mxu0 0.0
    %134 = vmatpush1.xpose.msra.mxu0 0.0
    %135 = vmatprep.subr.mxu0 0.0
    %136 = vmatpush1.xpose.msra.mxu0 0.0
    %137 = vmatprep.subr.mxu0 0.0
    %138 = vmatpush1.xpose.msra.mxu0 0.0
    %139 = vmatprep.subr.mxu0 0.0
    %140 = vmatpush1.xpose.msra.mxu0 0.0
    %141 = vmatprep.subr.mxu0 0.0
    %142 = vmatpush1.xpose.msra.mxu0 0.0
    %143 = vmatprep.subr.mxu0 0.0
    %144 = vmatpush1.xpose.msra.mxu0 0.0
    %145 = vmatprep.subr.mxu0 0.0
    %146 = vmatpush1.xpose.msra.mxu0 0.0
    %147 = vmatprep.subr.mxu0 0.0
    %148 = vmatpush1.xpose.msra.mxu0 0.0
    %149 = vmatprep.subr.mxu0 0.0
    %150 = vmatpush1.xpose.msra.mxu0 0.0
    %151 = vmatprep.subr.mxu0 0.0
    %152 = vmatpush1.xpose.msra.mxu0 0.0
    %153 = vmatprep.subr.mxu0 0.0
    %154 = vmatpush1.xpose.msra.mxu0 0.0
    %155 = vmatprep.subr.mxu0 0.0
    %156 = vmatpush1.xpose.msra.mxu0 0.0
    %157 = vmatprep.subr.mxu0 0.0
    %158 = vmatpush1.xpose.msra.mxu0 0.0
    %159 = vmatprep.subr.mxu0 0.0
    %160 = vmatpush1.xpose.msra.mxu0 0.0
    %161 = vmatprep.subr.mxu0 0.0
    %162 = vmatpush1.xpose.msra.mxu0 0.0
    %163 = vmatprep.subr.mxu0 0.0
    %164 = vmatpush1.xpose.msra.mxu0 0.0
    %165 = vmatprep.mubr.f32.mxu0 0.0
    %166 = vmatmul.mubr.f32.gmra.mrb[0].mxu0 %v51
    %v167 = vpop.f32.mrb[0].mxu0
    %v168 = vadd.f32 %v48, %v167
    %v169 = vpop.f32.mrb[0].mxu0
    %170 = vdwg.mxu0
    %171 = vst [vmem:[#allocation6] sm:$0x1] %v168
    // Predicated region
    $region18: #{tpu_custom_call.1} parent=1 // pred_check
      _
    $region19: #{tpu_custom_call.1} parent=1 // pred_check_branch
      %173 = sbr.rel (0) target = $region21
    $region20: #{tpu_custom_call.1} parent=1 // pred_region
      %s175 = ssub.s32 16, 16
      %176 = vsyncadd [#allocation5], %s175
      %s178 = sshll.u32 [#allocation6], 4
      %s179 = int_to_ptr.vmem [resolvable:$true] %s178
      %181 = dma.vmem_to_hbm [thread:$0]  %s179, 16, %s3, [#allocation5]
    $region21: #{tpu_custom_call.1} parent=1 // pred_fallthru
      _
    // Predicated region
    $region22: #{tpu_custom_call.1} parent=1 // pred_check
      _
    $region23: #{tpu_custom_call.1} parent=1 // pred_check_branch
      %183 = sbr.rel (0) target = $region25
    $region24: #{tpu_custom_call.1} parent=1 // pred_region
      %184 = dma.done [#allocation5], 16
    $region25: #{tpu_custom_call.1} parent=1 // pred_fallthru
      _
    %185 = vsyncpa [#allocation4], 1
    %186 = vsyncpa [#allocation5], 1

</llo_original>
